<compile_context>
chip_gen: v7x
topology: tpu7x:2x2x1
jax: 0.10.0
libtpu: 0.0.40
codegen_flags: <defaults>
</compile_context>

<pallas_src>
import jax
import jax.numpy as jnp
from jax.experimental import pallas as pl
from jax.experimental.pallas import tpu as pltpu

_SUBLANE = 8


def _round_up(n, m):
    return ((n + m - 1) // m) * m


def _mlp_kernel(x_ref, w1_ref, b1_ref, w2_ref, b2_ref, w3t_ref, b3t_ref, o_ref):
    # fc1 + ReLU  (cast x to bf16 in-kernel; f32 accumulation on the MXU)
    xb = x_ref[...].astype(jnp.bfloat16)
    h = jnp.dot(xb, w1_ref[...], preferred_element_type=jnp.float32)
    h = jnp.maximum(h + b1_ref[...], 0.0)
    # fc2 + ReLU
    h = jnp.dot(h.astype(jnp.bfloat16), w2_ref[...],
                preferred_element_type=jnp.float32)
    h = jnp.maximum(h + b2_ref[...], 0.0)
    # fc3, emitted transposed: contract w3_T (8, hidden) with h (tile_m, hidden)
    # over the hidden axis -> (8, tile_m).  Lane dim = row axis -> full-width
    # stores, and only 8 output sublanes instead of 128 padded lanes.
    out_t = jax.lax.dot_general(
        w3t_ref[...], h.astype(jnp.bfloat16),
        dimension_numbers=(((1,), (1,)), ((), ())),
        preferred_element_type=jnp.float32)
    o_ref[...] = (out_t + b3t_ref[...]).astype(o_ref.dtype)


def make_params(key, in_dim, hidden=128, out_dim=4):
    """Deterministic synthetic parameters (PyTorch Linear init, pre-transposed
    to (in_features, out_features))."""
    ks = jax.random.split(key, 6)

    def lin(kw, kb, fan_in, fan_out):
        bound = 1.0 / jnp.sqrt(fan_in)
        w = jax.random.uniform(kw, (fan_in, fan_out), jnp.float32, -bound, bound)
        b = jax.random.uniform(kb, (1, fan_out), jnp.float32, -bound, bound)
        return w, b

    w1, b1 = lin(ks[0], ks[1], in_dim, hidden)
    w2, b2 = lin(ks[2], ks[3], hidden, hidden)
    w3, b3 = lin(ks[4], ks[5], hidden, out_dim)
    return (w1, b1, w2, b2, w3, b3)


def prepare_params(params):
    """One-time setup: cast weights to bf16 (biases stay f32) and store fc3
    transposed with out_dim padded 4 -> 8 sublanes (zero rows are inert)."""
    w1, b1, w2, b2, w3, b3 = params
    in_dim, hidden = w1.shape
    out_dim = w3.shape[1]
    out_pad = _round_up(out_dim, _SUBLANE)            # 4 -> 8

    w3t = jnp.zeros((out_pad, hidden), jnp.float32).at[:out_dim, :].set(w3.T)
    b3t = jnp.zeros((out_pad, 1), jnp.float32).at[:out_dim, 0].set(b3[0])

    prepared = (
        w1.astype(jnp.bfloat16),
        b1,
        w2.astype(jnp.bfloat16),
        b2,
        w3t.astype(jnp.bfloat16),
        b3t,
    )
    dims = (in_dim, hidden, out_dim, out_pad)
    return prepared, dims


def tiny_nerf_forward(x, prepared_params, dims, *, tile_m=1024):
    """x: (N, in_dim) float32.  Returns (N, out_dim) float32."""
    w1, b1, w2, b2, w3t, b3t = prepared_params
    in_dim, hidden, out_dim, out_pad = dims
    N = x.shape[0]

    # Target >= 4 grid steps when N permits (>= 2 per v7x TensorCore) so each
    # core overlaps input DMA / output writeback with compute.
    while tile_m > 128 and pl.cdiv(N, tile_m) < 4:
        tile_m //= 2
    grid = (pl.cdiv(N, tile_m),)

    flops = 2 * N * (in_dim * hidden + hidden * hidden + hidden * out_pad)
    bytes_accessed = (
        x.size * 4                                    # f32 x stream (read once)
        + (w1.size + w2.size + w3t.size) * 2          # bf16 weights
        + (b1.size + b2.size + b3t.size) * 4          # f32 biases
        + out_pad * N * 4                             # compact f32 output
    )
    cost = pl.CostEstimate(flops=flops, transcendentals=0,
                           bytes_accessed=bytes_accessed)

    in_specs = [
        pl.BlockSpec((tile_m, in_dim), lambda i: (i, 0)),   # x tile (raw f32)
        pl.BlockSpec((in_dim, hidden), lambda i: (0, 0)),   # w1 (resident)
        pl.BlockSpec((1, hidden), lambda i: (0, 0)),        # b1
        pl.BlockSpec((hidden, hidden), lambda i: (0, 0)),   # w2
        pl.BlockSpec((1, hidden), lambda i: (0, 0)),        # b2
        pl.BlockSpec((out_pad, hidden), lambda i: (0, 0)),  # w3^T (8, hidden)
        pl.BlockSpec((out_pad, 1), lambda i: (0, 0)),       # b3^T (8, 1)
    ]
    out_specs = pl.BlockSpec((out_pad, tile_m), lambda i: (0, i))

    out_t = pl.pallas_call(
        _mlp_kernel,
        out_shape=jax.ShapeDtypeStruct((out_pad, N), jnp.float32),
        grid_spec=pltpu.PrefetchScalarGridSpec(
            num_scalar_prefetch=0,
            grid=grid,
            in_specs=in_specs,
            out_specs=out_specs,
        ),
        compiler_params=pltpu.CompilerParams(
            dimension_semantics=("parallel",),
            vmem_limit_bytes=16 * 1024 * 1024,
        ),
        cost_estimate=cost,
    )(x, w1, b1, w2, b2, w3t, b3t)

    # Compact (out_dim, N) -> (N, out_dim); only 16 B/row, kept inside the
    # same jit as the consumer so XLA can fuse it.
    return out_t[:out_dim, :].T


def reference_forward(x, params):
    w1, b1, w2, b2, w3, b3 = params
    h = jnp.maximum(x @ w1 + b1, 0.0)
    h = jnp.maximum(h @ w2 + b2, 0.0)
    return h @ w3 + b3


if __name__ == "__main__":
    num_encoding_func = 6
    in_dim = 3 + 2 * num_encoding_func * 3   # = 39
    hidden = 128
    # N = h * w * num_samples; small demo: 16 * 8 * 8 = 1024 sample points
    # -> tile_m shrinks 1024 -> 256, giving 4 grid steps (2 per v7x core).
    N = 1024

    key = jax.random.PRNGKey(0)
    kx, kp = jax.random.split(key)
    x = jax.random.normal(kx, (N, in_dim), dtype=jnp.float32)
    raw_params = make_params(kp, in_dim, hidden=hidden, out_dim=4)
    prepared, dims = prepare_params(raw_params)

    fwd = jax.jit(lambda xx: tiny_nerf_forward(xx, prepared, dims))
    out = jax.block_until_ready(fwd(x))

    ref = reference_forward(x, raw_params)
    assert out.shape == (N, 4)
    # bf16 operands with f32 accumulation: loosened tolerance vs f32 reference.
    assert jnp.allclose(out, ref, atol=2e-2, rtol=2e-2), "mismatch vs reference"

    print("KERNEL_OK")
</pallas_src>

<mosaic_0001>
module attributes {stable_mosaic.version = 11 : i64} {
  func.func @_mlp_kernel(%arg0: i32, %arg1: memref<256x39xf32, #tpu.memory_space<vmem>>, %arg2: memref<39x128xbf16, #tpu.memory_space<vmem>>, %arg3: memref<1x128xf32, #tpu.memory_space<vmem>>, %arg4: memref<128x128xbf16, #tpu.memory_space<vmem>>, %arg5: memref<1x128xf32, #tpu.memory_space<vmem>>, %arg6: memref<8x128xbf16, #tpu.memory_space<vmem>>, %arg7: memref<8x1xf32, #tpu.memory_space<vmem>>, %arg8: memref<8x256xf32, #tpu.memory_space<vmem>>) attributes {dimension_semantics = [#tpu.dimension_semantics<parallel>], iteration_bounds = array<i64: 4>, scalar_prefetch = 0 : i64, scratch_operands = 0 : i64, tpu.core_type = #tpu.core_type<tc>, window_params = [{transform_indices = @transform_0, window_bounds = array<i64: 256, 39>}, {pipeline_mode = #tpu.pipeline_mode<synchronous>, transform_indices = @transform_1, window_bounds = array<i64: 39, 128>}, {pipeline_mode = #tpu.pipeline_mode<synchronous>, transform_indices = @transform_2, window_bounds = array<i64: 1, 128>}, {pipeline_mode = #tpu.pipeline_mode<synchronous>, transform_indices = @transform_3, window_bounds = array<i64: 128, 128>}, {pipeline_mode = #tpu.pipeline_mode<synchronous>, transform_indices = @transform_4, window_bounds = array<i64: 1, 128>}, {pipeline_mode = #tpu.pipeline_mode<synchronous>, transform_indices = @transform_5, window_bounds = array<i64: 8, 128>}, {pipeline_mode = #tpu.pipeline_mode<synchronous>, transform_indices = @transform_6, window_bounds = array<i64: 8, 1>}, {transform_indices = @transform_7, window_bounds = array<i64: 8, 256>}]} {
    %c0 = arith.constant 0 : index
    %c0_0 = arith.constant 0 : index
    %0 = vector.load %arg1[%c0, %c0_0] : memref<256x39xf32, #tpu.memory_space<vmem>>, vector<256x39xf32>
    %1 = arith.truncf %0 : vector<256x39xf32> to vector<256x39xbf16>
    %c0_1 = arith.constant 0 : index
    %c0_2 = arith.constant 0 : index
    %2 = vector.load %arg2[%c0_1, %c0_2] : memref<39x128xbf16, #tpu.memory_space<vmem>>, vector<39x128xbf16>
    %cst = arith.constant dense<0.000000e+00> : vector<256x128xf32>
    %3 = tpu.matmul %1, %2, %cst {dimension_numbers = #tpu.dot_dimension_numbers<[1], [0], [0], [1], [0, 0, 1, 1], [], []>} : vector<256x39xbf16>, vector<39x128xbf16>, vector<256x128xf32> -> vector<256x128xf32>
    %c0_3 = arith.constant 0 : index
    %c0_4 = arith.constant 0 : index
    %4 = vector.load %arg3[%c0_3, %c0_4] : memref<1x128xf32, #tpu.memory_space<vmem>>, vector<1x128xf32>
    %5 = vector.broadcast %4 : vector<1x128xf32> to vector<256x128xf32>
    %6 = arith.addf %3, %5 : vector<256x128xf32>
    %cst_5 = arith.constant 0.000000e+00 : f32
    %7 = vector.broadcast %cst_5 : f32 to vector<256x128xf32>
    %8 = arith.maximumf %6, %7 : vector<256x128xf32>
    %9 = arith.truncf %8 : vector<256x128xf32> to vector<256x128xbf16>
    %c0_6 = arith.constant 0 : index
    %c0_7 = arith.constant 0 : index
    %10 = vector.load %arg4[%c0_6, %c0_7] : memref<128x128xbf16, #tpu.memory_space<vmem>>, vector<128x128xbf16>
    %cst_8 = arith.constant dense<0.000000e+00> : vector<256x128xf32>
    %11 = tpu.matmul %9, %10, %cst_8 {dimension_numbers = #tpu.dot_dimension_numbers<[1], [0], [0], [1], [0, 0, 1, 1], [], []>} : vector<256x128xbf16>, vector<128x128xbf16>, vector<256x128xf32> -> vector<256x128xf32>
    %c0_9 = arith.constant 0 : index
    %c0_10 = arith.constant 0 : index
    %12 = vector.load %arg5[%c0_9, %c0_10] : memref<1x128xf32, #tpu.memory_space<vmem>>, vector<1x128xf32>
    %13 = vector.broadcast %12 : vector<1x128xf32> to vector<256x128xf32>
    %14 = arith.addf %11, %13 : vector<256x128xf32>
    %cst_11 = arith.constant 0.000000e+00 : f32
    %15 = vector.broadcast %cst_11 : f32 to vector<256x128xf32>
    %16 = arith.maximumf %14, %15 : vector<256x128xf32>
    %c0_12 = arith.constant 0 : index
    %c0_13 = arith.constant 0 : index
    %17 = vector.load %arg6[%c0_12, %c0_13] : memref<8x128xbf16, #tpu.memory_space<vmem>>, vector<8x128xbf16>
    %18 = arith.truncf %16 : vector<256x128xf32> to vector<256x128xbf16>
    %cst_14 = arith.constant dense<0.000000e+00> : vector<8x256xf32>
    %19 = tpu.matmul %17, %18, %cst_14 {dimension_numbers = #tpu.dot_dimension_numbers<[1], [1], [0], [0], [0, 0, 1, 0], [], []>} : vector<8x128xbf16>, vector<256x128xbf16>, vector<8x256xf32> -> vector<8x256xf32>
    %c0_15 = arith.constant 0 : index
    %c0_16 = arith.constant 0 : index
    %20 = vector.load %arg7[%c0_15, %c0_16] : memref<8x1xf32, #tpu.memory_space<vmem>>, vector<8x1xf32>
    %21 = vector.broadcast %20 : vector<8x1xf32> to vector<8x256xf32>
    %22 = arith.addf %19, %21 : vector<8x256xf32>
    %c0_17 = arith.constant 0 : index
    %c0_18 = arith.constant 0 : index
    %23 = vector.load %arg8[%c0_17, %c0_18] : memref<8x256xf32, #tpu.memory_space<vmem>>, vector<8x256xf32>
    tpu.vector_store %arg8[%c0_17, %c0_18], %22 {strides = array<i32>} : memref<8x256xf32, #tpu.memory_space<vmem>>, vector<8x256xf32>,
    return
  }
  func.func @transform_0(%arg0: i32) -> (i32, i32) {
    %c0_i32 = arith.constant 0 : i32
    %c0_i32_0 = arith.constant 0 : i32
    return %arg0, %c0_i32 : i32, i32
  }
  func.func @transform_1(%arg0: i32) -> (i32, i32) {
    %c0_i32 = arith.constant 0 : i32
    %c0_i32_0 = arith.constant 0 : i32
    %c0_i32_1 = arith.constant 0 : i32
    return %c0_i32, %c0_i32_0 : i32, i32
  }
  func.func @transform_2(%arg0: i32) -> (i32, i32) {
    %c0_i32 = arith.constant 0 : i32
    %c0_i32_0 = arith.constant 0 : i32
    %c0_i32_1 = arith.constant 0 : i32
    return %c0_i32, %c0_i32_0 : i32, i32
  }
  func.func @transform_3(%arg0: i32) -> (i32, i32) {
    %c0_i32 = arith.constant 0 : i32
    %c0_i32_0 = arith.constant 0 : i32
    %c0_i32_1 = arith.constant 0 : i32
    return %c0_i32, %c0_i32_0 : i32, i32
  }
  func.func @transform_4(%arg0: i32) -> (i32, i32) {
    %c0_i32 = arith.constant 0 : i32
    %c0_i32_0 = arith.constant 0 : i32
    %c0_i32_1 = arith.constant 0 : i32
    return %c0_i32, %c0_i32_0 : i32, i32
  }
  func.func @transform_5(%arg0: i32) -> (i32, i32) {
    %c0_i32 = arith.constant 0 : i32
    %c0_i32_0 = arith.constant 0 : i32
    %c0_i32_1 = arith.constant 0 : i32
    return %c0_i32, %c0_i32_0 : i32, i32
  }
  func.func @transform_6(%arg0: i32) -> (i32, i32) {
    %c0_i32 = arith.constant 0 : i32
    %c0_i32_0 = arith.constant 0 : i32
    %c0_i32_1 = arith.constant 0 : i32
    return %c0_i32, %c0_i32_0 : i32, i32
  }
  func.func @transform_7(%arg0: i32) -> (i32, i32) {
    %c0_i32 = arith.constant 0 : i32
    %c0_i32_0 = arith.constant 0 : i32
    return %c0_i32, %arg0 : i32, i32
  }
}

</mosaic_0001>

<llo_original>
// kernel: _lambda_.1
$region0: #{_lambda_.1}
  #allocation0 [shape = 'u32[]', space=smem, size = 0x4, offset = 0x4, fixed_abs, tag = 'smem constant byte address 0x4 - core index']
  #allocation1 [shape = 'u32[144,128]{1,0:T(1,128)}', space=vmem, size = 0x12000, scoped, tag = 'internal scratch']
  %s0 = inlined_call_operand.vmem [shape: f32[1024,39], index: 0, kind: input, shape index: {}]
  %s1 = inlined_call_operand.vmem [shape: bf16[39,128], index: 1, kind: input, shape index: {}]
  %s2 = inlined_call_operand.vmem [shape: f32[1,128], index: 2, kind: input, shape index: {}]
  %s3 = inlined_call_operand.vmem [shape: bf16[128,128], index: 3, kind: input, shape index: {}]
  %s4 = inlined_call_operand.vmem [shape: f32[1,128], index: 4, kind: input, shape index: {}]
  %s5 = inlined_call_operand.vmem [shape: bf16[8,128], index: 5, kind: input, shape index: {}]
  %s6 = inlined_call_operand.vmem [shape: f32[8,1], index: 6, kind: input, shape index: {}]
  %s7 = inlined_call_operand.vmem [shape: f32[8,1024], index: 7, kind: output, shape index: {}]
  %s8 = sld [smem:[#allocation0]]
  $region61: #{_lambda_.1} parent=0
    _
  %s10 = ssub.s32 1, %s8
  %s11 = scalar_select 0, %s10, %s8
  loop: start=0, step=1, limit=6
  $region2: #{_lambda_.1} parent=0 // loop_pre_header
    _
  $region3: #{_lambda_.1} parent=0 // loop_header
    %s13 = sphi 0, %s17
    %p14 = scmp.ge.s32.totalorder %s13, 6
    %s23 = sphi 0, %s25
    %s26 = sphi 0, %s23
    %s27 = sphi 0, %s26
    %s43 = sphi 0, %s27
    %s47 = sphi 0, %s47
    %s49 = sphi 0, %s47
    %s50 = sphi 0, %s49
    %s64 = sphi 0, %s50
    %s68 = sphi 0, %s68
    %s70 = sphi 0, %s68
    %s71 = sphi 0, %s70
    %s85 = sphi 0, %s71
    %s89 = sphi 0, %s89
    %s91 = sphi 0, %s89
    %s92 = sphi 0, %s91
    %s106 = sphi 0, %s92
    %s110 = sphi 0, %s110
    %s112 = sphi 0, %s110
    %s113 = sphi 0, %s112
    %s127 = sphi 0, %s113
    %s131 = sphi 0, %s131
    %s133 = sphi 0, %s131
    %s134 = sphi 0, %s133
    %s148 = sphi 0, %s134
    %s152 = sphi 0, %s152
    %s154 = sphi 0, %s152
    %s155 = sphi 0, %s154
    %s169 = sphi 0, %s155
    %s175 = sphi 0, %s177
    %s178 = sphi 0, %s175
    %s179 = sphi 0, %s178
    %s195 = sphi 0, %s179
  $region4: #{_lambda_.1} parent=0 // loop_header_branch
    %16 = sbr.rel (%p14) target = $region8
  $region5: #{_lambda_.1} parent=0 // loop_body
    %s18 = ssub.s32 %s13, 1
    %s19 = ssub.s32 %s13, 2
    %s20 = sadd.s32 %s13, 1
    %s21 = ssub.s32 %s13, %s20
    %p22 = scmp.eq.s32.totalorder %s21, 0
    %s24 = sadd.s32 %s23, 1
    %s25 = scalar_select %p22, %s23, %s24
    %p28 = pneg %p22
    %p29 = scmp.eq.s32.totalorder %s13, 3
    %p30 = por %p28, %p29
    %p31 = scmp.ne.s32.totalorder %s23, %s26
    %p32 = scmp.eq.s32.totalorder %s13, 0
    %p33 = por %p31, %p32
    %p34 = scmp.ne.s32.totalorder %s23, %s26
    %p35 = scmp.eq.s32.totalorder %s18, 3
    %p36 = por %p34, %p35
    %p37 = scmp.ne.s32.totalorder %s26, %s27
    %p38 = scmp.eq.s32.totalorder %s18, 0
    %p39 = por %p37, %p38
    %p40 = scmp.ne.s32.totalorder %s26, %s27
    %p41 = scmp.eq.s32.totalorder %s19, 3
    %p42 = por %p40, %p41
    %p44 = scmp.ne.s32.totalorder %s27, %s43
    %p45 = scmp.eq.s32.totalorder %s19, 0
    %p46 = por %p44, %p45
    %s48 = sadd.s32 %s47, 1
    %p51 = scmp.eq.s32.totalorder %s13, 3
    %p52 = scmp.ne.s32.totalorder %s47, %s49
    %p53 = scmp.eq.s32.totalorder %s13, 0
    %p54 = por %p52, %p53
    %p55 = scmp.ne.s32.totalorder %s47, %s49
    %p56 = scmp.eq.s32.totalorder %s18, 3
    %p57 = por %p55, %p56
    %p58 = scmp.ne.s32.totalorder %s49, %s50
    %p59 = scmp.eq.s32.totalorder %s18, 0
    %p60 = por %p58, %p59
    %p61 = scmp.ne.s32.totalorder %s49, %s50
    %p62 = scmp.eq.s32.totalorder %s19, 3
    %p63 = por %p61, %p62
    %p65 = scmp.ne.s32.totalorder %s50, %s64
    %p66 = scmp.eq.s32.totalorder %s19, 0
    %p67 = por %p65, %p66
    %s69 = sadd.s32 %s68, 1
    %p72 = scmp.eq.s32.totalorder %s13, 3
    %p73 = scmp.ne.s32.totalorder %s68, %s70
    %p74 = scmp.eq.s32.totalorder %s13, 0
    %p75 = por %p73, %p74
    %p76 = scmp.ne.s32.totalorder %s68, %s70
    %p77 = scmp.eq.s32.totalorder %s18, 3
    %p78 = por %p76, %p77
    %p79 = scmp.ne.s32.totalorder %s70, %s71
    %p80 = scmp.eq.s32.totalorder %s18, 0
    %p81 = por %p79, %p80
    %p82 = scmp.ne.s32.totalorder %s70, %s71
    %p83 = scmp.eq.s32.totalorder %s19, 3
    %p84 = por %p82, %p83
    %p86 = scmp.ne.s32.totalorder %s71, %s85
    %p87 = scmp.eq.s32.totalorder %s19, 0
    %p88 = por %p86, %p87
    %s90 = sadd.s32 %s89, 1
    %p93 = scmp.eq.s32.totalorder %s13, 3
    %p94 = scmp.ne.s32.totalorder %s89, %s91
    %p95 = scmp.eq.s32.totalorder %s13, 0
    %p96 = por %p94, %p95
    %p97 = scmp.ne.s32.totalorder %s89, %s91
    %p98 = scmp.eq.s32.totalorder %s18, 3
    %p99 = por %p97, %p98
    %p100 = scmp.ne.s32.totalorder %s91, %s92
    %p101 = scmp.eq.s32.totalorder %s18, 0
    %p102 = por %p100, %p101
    %p103 = scmp.ne.s32.totalorder %s91, %s92
    %p104 = scmp.eq.s32.totalorder %s19, 3
    %p105 = por %p103, %p104
    %p107 = scmp.ne.s32.totalorder %s92, %s106
    %p108 = scmp.eq.s32.totalorder %s19, 0
    %p109 = por %p107, %p108
    %s111 = sadd.s32 %s110, 1
    %p114 = scmp.eq.s32.totalorder %s13, 3
    %p115 = scmp.ne.s32.totalorder %s110, %s112
    %p116 = scmp.eq.s32.totalorder %s13, 0
    %p117 = por %p115, %p116
    %p118 = scmp.ne.s32.totalorder %s110, %s112
    %p119 = scmp.eq.s32.totalorder %s18, 3
    %p120 = por %p118, %p119
    %p121 = scmp.ne.s32.totalorder %s112, %s113
    %p122 = scmp.eq.s32.totalorder %s18, 0
    %p123 = por %p121, %p122
    %p124 = scmp.ne.s32.totalorder %s112, %s113
    %p125 = scmp.eq.s32.totalorder %s19, 3
    %p126 = por %p124, %p125
    %p128 = scmp.ne.s32.totalorder %s113, %s127
    %p129 = scmp.eq.s32.totalorder %s19, 0
    %p130 = por %p128, %p129
    %s132 = sadd.s32 %s131, 1
    %p135 = scmp.eq.s32.totalorder %s13, 3
    %p136 = scmp.ne.s32.totalorder %s131, %s133
    %p137 = scmp.eq.s32.totalorder %s13, 0
    %p138 = por %p136, %p137
    %p139 = scmp.ne.s32.totalorder %s131, %s133
    %p140 = scmp.eq.s32.totalorder %s18, 3
    %p141 = por %p139, %p140
    %p142 = scmp.ne.s32.totalorder %s133, %s134
    %p143 = scmp.eq.s32.totalorder %s18, 0
    %p144 = por %p142, %p143
    %p145 = scmp.ne.s32.totalorder %s133, %s134
    %p146 = scmp.eq.s32.totalorder %s19, 3
    %p147 = por %p145, %p146
    %p149 = scmp.ne.s32.totalorder %s134, %s148
    %p150 = scmp.eq.s32.totalorder %s19, 0
    %p151 = por %p149, %p150
    %s153 = sadd.s32 %s152, 1
    %p156 = scmp.eq.s32.totalorder %s13, 3
    %p157 = scmp.ne.s32.totalorder %s152, %s154
    %p158 = scmp.eq.s32.totalorder %s13, 0
    %p159 = por %p157, %p158
    %p160 = scmp.ne.s32.totalorder %s152, %s154
    %p161 = scmp.eq.s32.totalorder %s18, 3
    %p162 = por %p160, %p161
    %p163 = scmp.ne.s32.totalorder %s154, %s155
    %p164 = scmp.eq.s32.totalorder %s18, 0
    %p165 = por %p163, %p164
    %p166 = scmp.ne.s32.totalorder %s154, %s155
    %p167 = scmp.eq.s32.totalorder %s19, 3
    %p168 = por %p166, %p167
    %p170 = scmp.ne.s32.totalorder %s155, %s169
    %p171 = scmp.eq.s32.totalorder %s19, 0
    %p172 = por %p170, %p171
    %s173 = ssub.s32 %s13, %s20
    %p174 = scmp.eq.s32.totalorder %s173, 0
    %s176 = sadd.s32 %s175, 1
    %s177 = scalar_select %p174, %s175, %s176
    %p180 = pneg %p174
    %p181 = scmp.eq.s32.totalorder %s13, 3
    %p182 = por %p180, %p181
    %p183 = scmp.ne.s32.totalorder %s175, %s178
    %p184 = scmp.eq.s32.totalorder %s13, 0
    %p185 = por %p183, %p184
    %p186 = scmp.ne.s32.totalorder %s175, %s178
    %p187 = scmp.eq.s32.totalorder %s18, 3
    %p188 = por %p186, %p187
    %p189 = scmp.ne.s32.totalorder %s178, %s179
    %p190 = scmp.eq.s32.totalorder %s18, 0
    %p191 = por %p189, %p190
    %p192 = scmp.ne.s32.totalorder %s178, %s179
    %p193 = scmp.eq.s32.totalorder %s19, 3
    %p194 = por %p192, %p193
    %p196 = scmp.ne.s32.totalorder %s179, %s195
    %p197 = scmp.eq.s32.totalorder %s19, 0
    %p198 = por %p196, %p197
    %p199 = scmp.le.s32.totalorder 1, %s13
    %p200 = scmp.lt.s32.totalorder %s13, 5
    %p201 = pnand %p199, %p200
    %p202 = pneg %p201
    // Predicated region
    $region9: #{_lambda_.1} parent=5 // pred_check
      _
    $region10: #{_lambda_.1} parent=5 // pred_check_branch
      %204 = sbr.rel (%p201) target = $region12
    $region11: #{_lambda_.1} parent=5 // pred_region
      %s205 = ssub.s32 %s13, 1
      // Predicated region
      $region13: #{_lambda_.1} parent=11 // pred_check
        %p206 = pneg %p60
      $region14: #{_lambda_.1} parent=11 // pred_check_branch
        %208 = sbr.rel (%p206) target = $region16
      $region15: #{_lambda_.1} parent=11 // pred_region
        _
      $region16: #{_lambda_.1} parent=11 // pred_fallthru
        _
      // Predicated region
      $region17: #{_lambda_.1} parent=11 // pred_check
        %p209 = pneg %p81
      $region18: #{_lambda_.1} parent=11 // pred_check_branch
        %211 = sbr.rel (%p209) target = $region20
      $region19: #{_lambda_.1} parent=11 // pred_region
        _
      $region20: #{_lambda_.1} parent=11 // pred_fallthru
        _
      // Predicated region
      $region21: #{_lambda_.1} parent=11 // pred_check
        %p212 = pneg %p102
      $region22: #{_lambda_.1} parent=11 // pred_check_branch
        %214 = sbr.rel (%p212) target = $region24
      $region23: #{_lambda_.1} parent=11 // pred_region
        _
      $region24: #{_lambda_.1} parent=11 // pred_fallthru
        _
      // Predicated region
      $region25: #{_lambda_.1} parent=11 // pred_check
        %p215 = pneg %p123
      $region26: #{_lambda_.1} parent=11 // pred_check_branch
        %217 = sbr.rel (%p215) target = $region28
      $region27: #{_lambda_.1} parent=11 // pred_region
        _
      $region28: #{_lambda_.1} parent=11 // pred_fallthru
        _
      // Predicated region
      $region29: #{_lambda_.1} parent=11 // pred_check
        %p218 = pneg %p144
      $region30: #{_lambda_.1} parent=11 // pred_check_branch
        %220 = sbr.rel (%p218) target = $region32
      $region31: #{_lambda_.1} parent=11 // pred_region
        _
      $region32: #{_lambda_.1} parent=11 // pred_fallthru
        _
      // Predicated region
      $region33: #{_lambda_.1} parent=11 // pred_check
        %p221 = pneg %p165
      $region34: #{_lambda_.1} parent=11 // pred_check_branch
        %223 = sbr.rel (%p221) target = $region36
      $region35: #{_lambda_.1} parent=11 // pred_region
        _
      $region36: #{_lambda_.1} parent=11 // pred_fallthru
        _
    $region12: #{_lambda_.1} parent=5 // pred_fallthru
      _
    %p224 = scmp.lt.s32.totalorder %s13, 4
    // Predicated region
    $region37: #{_lambda_.1} parent=5 // pred_check
      %p225 = pneg %p224
    $region38: #{_lambda_.1} parent=5 // pred_check_branch
      %227 = sbr.rel (%p225) target = $region40
    $region39: #{_lambda_.1} parent=5 // pred_region
      // Predicated region
      $region41: #{_lambda_.1} parent=39 // pred_check
        %p228 = pneg %p33
      $region42: #{_lambda_.1} parent=39 // pred_check_branch
        %230 = sbr.rel (%p228) target = $region44
      $region43: #{_lambda_.1} parent=39 // pred_region
        %s231 = smul.u32 32, %s13
        %p232 = scmp.lt.s32.totalorder %s231, 127
        %s233 = scalar_select %p232, %s231, 127
        %s234 = smul.addr %s233, 8
        %s235 = scalar_lea.vmem %s0, %s234
        %s236 = smul.u32 32, %s13
      $region44: #{_lambda_.1} parent=39 // pred_fallthru
        _
    $region40: #{_lambda_.1} parent=5 // pred_fallthru
      _
    %p237 = scmp.le.s32.totalorder 1, %s13
    %p238 = scmp.lt.s32.totalorder %s13, 5
    %p239 = pnand %p237, %p238
    %p240 = pneg %p239
    // Predicated region
    $region45: #{_lambda_.1} parent=5 // pred_check
      _
    $region46: #{_lambda_.1} parent=5 // pred_check_branch
      %242 = sbr.rel (%p239) target = $region48
    $region47: #{_lambda_.1} parent=5 // pred_region
      %s243 = ssub.s32 %s13, 1
      %s244 = smul.u32 32, %s18
      %p245 = scmp.lt.s32.totalorder %s244, 127
      %s246 = scalar_select %p245, %s244, 127
      %s247 = smul.addr %s246, 8
      %s248 = scalar_lea.vmem %s0, %s247
      %p249 = pneg %p39
      %p250 = pneg %p36
      %p251 = pneg %p60
      %p252 = pneg %p57
      %p253 = pneg %p81
      %p254 = pneg %p78
      %p255 = pneg %p102
      %p256 = pneg %p99
      %p257 = pneg %p123
      %p258 = pneg %p120
      %p259 = pneg %p144
      %p260 = pneg %p141
      %p261 = pneg %p165
      %p262 = pneg %p162
      %p263 = pneg %p191
      %p264 = pneg %p188
      %s265 = smul.u32 2, %s18
      %p266 = scmp.lt.s32.totalorder %s265, 7
      %s267 = scalar_select %p266, %s265, 7
      %s268 = smul.addr %s267, 8
      %s269 = scalar_lea.vmem %s7, %s268
      %s270 = smul.u32 32, %s18
      %p271 = scmp.lt.s32.totalorder %s270, 127
      %s272 = scalar_select %p271, %s270, 127
      %s273 = smul.addr %s272, 8
      %s274 = scalar_lea.vmem %s0, %s273
      %s275 = smul.u32 32, %s18
      %s276 = smul.u32 2, %s18
      %p277 = scmp.lt.s32.totalorder %s276, 7
      %s278 = scalar_select %p277, %s276, 7
      %s279 = smul.addr %s278, 8
      %s280 = scalar_lea.vmem %s7, %s279
      %s281 = smul.u32 2, %s18
      %v283 = vld [vmem:[%s274] sm:$0xff]
      %v284 = vld [vmem:[%s274 + $0x8] sm:$0xff]
      %v285 = vld [vmem:[%s274 + $0x10] sm:$0xff]
      %v286 = vld [vmem:[%s274 + $0x18] sm:$0xff]
      %v287 = vld [vmem:[%s274 + $0x20] sm:$0xff]
      %v288 = vld [vmem:[%s274 + $0x28] sm:$0xff]
      %v289 = vld [vmem:[%s274 + $0x30] sm:$0xff]
      %v290 = vld [vmem:[%s274 + $0x38] sm:$0xff]
      %v291 = vld [vmem:[%s274 + $0x40] sm:$0xff]
      %v292 = vld [vmem:[%s274 + $0x48] sm:$0xff]
      %v293 = vld [vmem:[%s274 + $0x50] sm:$0xff]
      %v294 = vld [vmem:[%s274 + $0x58] sm:$0xff]
      %v295 = vld [vmem:[%s274 + $0x60] sm:$0xff]
      %v296 = vld [vmem:[%s274 + $0x68] sm:$0xff]
      %v297 = vld [vmem:[%s274 + $0x70] sm:$0xff]
      %v298 = vld [vmem:[%s274 + $0x78] sm:$0xff]
      %v299 = vld [vmem:[%s274 + $0x80] sm:$0xff]
      %v300 = vld [vmem:[%s274 + $0x88] sm:$0xff]
      %v301 = vld [vmem:[%s274 + $0x90] sm:$0xff]
      %v302 = vld [vmem:[%s274 + $0x98] sm:$0xff]
      %v303 = vld [vmem:[%s274 + $0xa0] sm:$0xff]
      %v304 = vld [vmem:[%s274 + $0xa8] sm:$0xff]
      %v305 = vld [vmem:[%s274 + $0xb0] sm:$0xff]
      %v306 = vld [vmem:[%s274 + $0xb8] sm:$0xff]
      %v307 = vld [vmem:[%s274 + $0xc0] sm:$0xff]
      %v308 = vld [vmem:[%s274 + $0xc8] sm:$0xff]
      %v309 = vld [vmem:[%s274 + $0xd0] sm:$0xff]
      %v310 = vld [vmem:[%s274 + $0xd8] sm:$0xff]
      %v311 = vld [vmem:[%s274 + $0xe0] sm:$0xff]
      %v312 = vld [vmem:[%s274 + $0xe8] sm:$0xff]
      %v313 = vld [vmem:[%s274 + $0xf0] sm:$0xff]
      %v314 = vld [vmem:[%s274 + $0xf8] sm:$0xff]
      %v315 = vpack.c.bf16 %v284, %v283
      %v316 = vpack.c.bf16 %v286, %v285
      %v317 = vpack.c.bf16 %v288, %v287
      %v318 = vpack.c.bf16 %v290, %v289
      %v319 = vpack.c.bf16 %v292, %v291
      %v320 = vpack.c.bf16 %v294, %v293
      %v321 = vpack.c.bf16 %v296, %v295
      %v322 = vpack.c.bf16 %v298, %v297
      %v323 = vpack.c.bf16 %v300, %v299
      %v324 = vpack.c.bf16 %v302, %v301
      %v325 = vpack.c.bf16 %v304, %v303
      %v326 = vpack.c.bf16 %v306, %v305
      %v327 = vpack.c.bf16 %v308, %v307
      %v328 = vpack.c.bf16 %v310, %v309
      %v329 = vpack.c.bf16 %v312, %v311
      %v330 = vpack.c.bf16 %v314, %v313
      %v331 = vld [vmem:[%s1] sm:$0xf]
      %v332 = vld [vmem:[%s1 + $0x4] sm:$0xf]
      %v333 = vld [vmem:[%s1 + $0x8] sm:$0xf]
      %v334 = vld [vmem:[%s1 + $0xc] sm:$0xf]
      %v335 = vld [vmem:[%s1 + $0x10] sm:$0xf]
      %v336 = vld [vmem:[%s2] sm:$0x1]
      %v338 = vlaneseq
      %v339 = vshrl.u32 %v338, 7
      %v340 = vsub.s32 0, %v339
      %v341 = vrot.slane %v336, %v340
      %v348 = vunpack.c.l.b16 %v331
      %v349 = vunpack.c.l.b16 %v332
      %v350 = vunpack.c.l.b16 %v333
      %v351 = vunpack.c.l.b16 %v334
      %v352 = vunpack.c.l.b16 %v335
      %v353 = vpack.c.b16 %v349, %v348
      %v354 = vpack.c.b16 %v351, %v350
      %v355 = vpack.c.b16 %v352, %v352
      %vm358 = vcmask 318464
      %v360 = vsel %vm358, %v315, 0
      %v363 = vsel %vm358, %v316, 0
      %v366 = vsel %vm358, %v317, 0
      %v369 = vsel %vm358, %v318, 0
      %v372 = vsel %vm358, %v319, 0
      %v375 = vsel %vm358, %v320, 0
      %v378 = vsel %vm358, %v321, 0
      %v381 = vsel %vm358, %v322, 0
      %v384 = vsel %vm358, %v323, 0
      %v387 = vsel %vm358, %v324, 0
      %v390 = vsel %vm358, %v325, 0
      %v393 = vsel %vm358, %v326, 0
      %v396 = vsel %vm358, %v327, 0
      %v399 = vsel %vm358, %v328, 0
      %v402 = vsel %vm358, %v329, 0
      %v405 = vsel %vm358, %v330, 0
      %vm407 = vcmask 1042432
      %vm408 = vcmask 1043456
      %v409 = vsel %vm407, 4294967295, 65535
      %v410 = vsel %vm408, %v409, 0
      %v412 = vand.u32 %v355, %v410
      %414 = vmatprep.subr.bf16.mxu0 0
      %415 = vmatpush1.bf16.msra.mxu0 %v353
      %416 = vmatprep.subr.bf16.mxu0 0
      %417 = vmatpush1.bf16.msra.mxu0 %v354
      %418 = vmatprep.subr.bf16.mxu0 0
      %419 = vmatpush1.bf16.msra.mxu0 %v412
      %420 = vmatprep.subr.bf16.mxu0 0
      %421 = vmatpush1.bf16.msra.mxu0 0
      %422 = vmatprep.subr.bf16.mxu0 0
      %423 = vmatpush1.bf16.msra.mxu0 0
      %424 = vmatprep.subr.bf16.mxu0 0
      %425 = vmatpush1.bf16.msra.mxu0 0
      %426 = vmatprep.subr.bf16.mxu0 0
      %427 = vmatpush1.bf16.msra.mxu0 0
      %428 = vmatprep.subr.bf16.mxu0 0
      %429 = vmatpush1.bf16.msra.mxu0 0
      %430 = vmatprep.subr.bf16.mxu0 0
      %431 = vmatpush1.bf16.msra.mxu0 0
      %432 = vmatprep.subr.bf16.mxu0 0
      %433 = vmatpush1.bf16.msra.mxu0 0
      %434 = vmatprep.subr.bf16.mxu0 0
      %435 = vmatpush1.bf16.msra.mxu0 0
      %436 = vmatprep.subr.bf16.mxu0 0
      %437 = vmatpush1.bf16.msra.mxu0 0
      %438 = vmatprep.subr.bf16.mxu0 0
      %439 = vmatpush1.bf16.msra.mxu0 0
      %440 = vmatprep.subr.bf16.mxu0 0
      %441 = vmatpush1.bf16.msra.mxu0 0
      %442 = vmatprep.subr.bf16.mxu0 0
      %443 = vmatpush1.bf16.msra.mxu0 0
      %444 = vmatprep.subr.bf16.mxu0 0
      %445 = vmatpush1.bf16.msra.mxu0 0
      %446 = vmatprep.mubr.bf16.mxu0 0
      %447 = vmatmul.mubr.bf16.gmra.mrb[0].mxu0 %v360
      %v448 = vpop.f32.mrb[0].mxu0
      %v449 = vadd.f32 %v341, %v448
      %v450 = vpop.f32.mrb[0].mxu0
      %v451 = vpop.f32.mrb[0].mxu0
      %v452 = vadd.f32 %v341, %v451
      %v453 = vpop.f32.mrb[0].mxu0
      %454 = vmatprep.mubr.bf16.mxu0 0
      %455 = vmatmul.mubr.bf16.gmra.mrb[0].mxu0 %v363
      %v456 = vpop.f32.mrb[0].mxu0
      %v457 = vadd.f32 %v341, %v456
      %v458 = vpop.f32.mrb[0].mxu0
      %v459 = vpop.f32.mrb[0].mxu0
      %v460 = vadd.f32 %v341, %v459
      %v461 = vpop.f32.mrb[0].mxu0
      %462 = vmatprep.mubr.bf16.mxu0 0
      %463 = vmatmul.mubr.bf16.gmra.mrb[0].mxu0 %v366
      %v464 = vpop.f32.mrb[0].mxu0
      %v465 = vadd.f32 %v341, %v464
      %v466 = vpop.f32.mrb[0].mxu0
      %v467 = vpop.f32.mrb[0].mxu0
      %v468 = vadd.f32 %v341, %v467
      %v469 = vpop.f32.mrb[0].mxu0
      %470 = vmatprep.mubr.bf16.mxu0 0
      %471 = vmatmul.mubr.bf16.gmra.mrb[0].mxu0 %v369
      %v472 = vpop.f32.mrb[0].mxu0
      %v473 = vadd.f32 %v341, %v472
      %v474 = vpop.f32.mrb[0].mxu0
      %v475 = vpop.f32.mrb[0].mxu0
      %v476 = vadd.f32 %v341, %v475
      %v477 = vpop.f32.mrb[0].mxu0
      %478 = vmatprep.mubr.bf16.mxu0 0
      %479 = vmatmul.mubr.bf16.gmra.mrb[0].mxu0 %v372
      %v480 = vpop.f32.mrb[0].mxu0
      %v481 = vadd.f32 %v341, %v480
      %v482 = vpop.f32.mrb[0].mxu0
      %v483 = vpop.f32.mrb[0].mxu0
      %v484 = vadd.f32 %v341, %v483
      %v485 = vpop.f32.mrb[0].mxu0
      %486 = vmatprep.mubr.bf16.mxu0 0
      %487 = vmatmul.mubr.bf16.gmra.mrb[0].mxu0 %v375
      %v488 = vpop.f32.mrb[0].mxu0
      %v489 = vadd.f32 %v341, %v488
      %v490 = vpop.f32.mrb[0].mxu0
      %v491 = vpop.f32.mrb[0].mxu0
      %v492 = vadd.f32 %v341, %v491
      %v493 = vpop.f32.mrb[0].mxu0
      %494 = vmatprep.mubr.bf16.mxu0 0
      %495 = vmatmul.mubr.bf16.gmra.mrb[0].mxu0 %v378
      %v496 = vpop.f32.mrb[0].mxu0
      %v497 = vadd.f32 %v341, %v496
      %v498 = vpop.f32.mrb[0].mxu0
      %v499 = vpop.f32.mrb[0].mxu0
      %v500 = vadd.f32 %v341, %v499
      %v501 = vpop.f32.mrb[0].mxu0
      %502 = vmatprep.mubr.bf16.mxu0 0
      %503 = vmatmul.mubr.bf16.gmra.mrb[0].mxu0 %v381
      %v504 = vpop.f32.mrb[0].mxu0
      %v505 = vadd.f32 %v341, %v504
      %v506 = vpop.f32.mrb[0].mxu0
      %v507 = vpop.f32.mrb[0].mxu0
      %v508 = vadd.f32 %v341, %v507
      %v509 = vpop.f32.mrb[0].mxu0
      %510 = vmatprep.mubr.bf16.mxu0 0
      %511 = vmatmul.mubr.bf16.gmra.mrb[0].mxu0 %v384
      %v512 = vpop.f32.mrb[0].mxu0
      %v513 = vadd.f32 %v341, %v512
      %v514 = vpop.f32.mrb[0].mxu0
      %v515 = vpop.f32.mrb[0].mxu0
      %v516 = vadd.f32 %v341, %v515
      %v517 = vpop.f32.mrb[0].mxu0
      %518 = vmatprep.mubr.bf16.mxu0 0
      %519 = vmatmul.mubr.bf16.gmra.mrb[0].mxu0 %v387
      %v520 = vpop.f32.mrb[0].mxu0
      %v521 = vadd.f32 %v341, %v520
      %v522 = vpop.f32.mrb[0].mxu0
      %v523 = vpop.f32.mrb[0].mxu0
      %v524 = vadd.f32 %v341, %v523
      %v525 = vpop.f32.mrb[0].mxu0
      %526 = vmatprep.mubr.bf16.mxu0 0
      %527 = vmatmul.mubr.bf16.gmra.mrb[0].mxu0 %v390
      %v528 = vpop.f32.mrb[0].mxu0
      %v529 = vadd.f32 %v341, %v528
      %v530 = vpop.f32.mrb[0].mxu0
      %v531 = vpop.f32.mrb[0].mxu0
      %v532 = vadd.f32 %v341, %v531
      %v533 = vpop.f32.mrb[0].mxu0
      %534 = vmatprep.mubr.bf16.mxu0 0
      %535 = vmatmul.mubr.bf16.gmra.mrb[0].mxu0 %v393
      %v536 = vpop.f32.mrb[0].mxu0
      %v537 = vadd.f32 %v341, %v536
      %v538 = vpop.f32.mrb[0].mxu0
      %v539 = vpop.f32.mrb[0].mxu0
      %v540 = vadd.f32 %v341, %v539
      %v541 = vpop.f32.mrb[0].mxu0
      %542 = vmatprep.mubr.bf16.mxu0 0
      %543 = vmatmul.mubr.bf16.gmra.mrb[0].mxu0 %v396
      %v544 = vpop.f32.mrb[0].mxu0
      %v545 = vadd.f32 %v341, %v544
      %v546 = vpop.f32.mrb[0].mxu0
      %v547 = vpop.f32.mrb[0].mxu0
      %v548 = vadd.f32 %v341, %v547
      %v549 = vpop.f32.mrb[0].mxu0
      %550 = vmatprep.mubr.bf16.mxu0 0
      %551 = vmatmul.mubr.bf16.gmra.mrb[0].mxu0 %v399
      %v552 = vpop.f32.mrb[0].mxu0
      %v553 = vadd.f32 %v341, %v552
      %v554 = vpop.f32.mrb[0].mxu0
      %v555 = vpop.f32.mrb[0].mxu0
      %v556 = vadd.f32 %v341, %v555
      %v557 = vpop.f32.mrb[0].mxu0
      %558 = vmatprep.mubr.bf16.mxu0 0
      %559 = vmatmul.mubr.bf16.gmra.mrb[0].mxu0 %v402
      %v560 = vpop.f32.mrb[0].mxu0
      %v561 = vadd.f32 %v341, %v560
      %v562 = vpop.f32.mrb[0].mxu0
      %v563 = vpop.f32.mrb[0].mxu0
      %v564 = vadd.f32 %v341, %v563
      %v565 = vpop.f32.mrb[0].mxu0
      %566 = vmatprep.mubr.bf16.mxu0 0
      %567 = vmatmul.mubr.bf16.gmra.mrb[0].mxu0 %v405
      %v568 = vpop.f32.mrb[0].mxu0
      %v569 = vadd.f32 %v341, %v568
      %v570 = vpop.f32.mrb[0].mxu0
      %v571 = vpop.f32.mrb[0].mxu0
      %v572 = vadd.f32 %v341, %v571
      %v573 = vpop.f32.mrb[0].mxu0
      %574 = vdwg.mxu0
      %v575 = vmax.f32 %v449, 0.0
      %v576 = vmax.f32 %v452, 0.0
      %v577 = vmax.f32 %v457, 0.0
      %v578 = vmax.f32 %v460, 0.0
      %v579 = vmax.f32 %v465, 0.0
      %v580 = vmax.f32 %v468, 0.0
      %v581 = vmax.f32 %v473, 0.0
      %v582 = vmax.f32 %v476, 0.0
      %v583 = vmax.f32 %v481, 0.0
      %v584 = vmax.f32 %v484, 0.0
      %v585 = vmax.f32 %v489, 0.0
      %v586 = vmax.f32 %v492, 0.0
      %v587 = vmax.f32 %v497, 0.0
      %v588 = vmax.f32 %v500, 0.0
      %v589 = vmax.f32 %v505, 0.0
      %v590 = vmax.f32 %v508, 0.0
      %v591 = vmax.f32 %v513, 0.0
      %v592 = vmax.f32 %v516, 0.0
      %v593 = vmax.f32 %v521, 0.0
      %v594 = vmax.f32 %v524, 0.0
      %v595 = vmax.f32 %v529, 0.0
      %v596 = vmax.f32 %v532, 0.0
      %v597 = vmax.f32 %v537, 0.0
      %v598 = vmax.f32 %v540, 0.0
      %v599 = vmax.f32 %v545, 0.0
      %v600 = vmax.f32 %v548, 0.0
      %v601 = vmax.f32 %v553, 0.0
      %v602 = vmax.f32 %v556, 0.0
      %v603 = vmax.f32 %v561, 0.0
      %v604 = vmax.f32 %v564, 0.0
      %v605 = vmax.f32 %v569, 0.0
      %v606 = vmax.f32 %v572, 0.0
      %v607 = vpack.c.bf16 %v576, %v575
      %v608 = vpack.c.bf16 %v578, %v577
      %v609 = vpack.c.bf16 %v580, %v579
      %v610 = vpack.c.bf16 %v582, %v581
      %v611 = vpack.c.bf16 %v584, %v583
      %v612 = vpack.c.bf16 %v586, %v585
      %v613 = vpack.c.bf16 %v588, %v587
      %v614 = vpack.c.bf16 %v590, %v589
      %v615 = vpack.c.bf16 %v592, %v591
      %v616 = vpack.c.bf16 %v594, %v593
      %v617 = vpack.c.bf16 %v596, %v595
      %v618 = vpack.c.bf16 %v598, %v597
      %v619 = vpack.c.bf16 %v600, %v599
      %v620 = vpack.c.bf16 %v602, %v601
      %v621 = vpack.c.bf16 %v604, %v603
      %v622 = vpack.c.bf16 %v606, %v605
      %v623 = vld [vmem:[%s3] sm:$0xf]
      %v624 = vld [vmem:[%s3 + $0x4] sm:$0xf]
      %v625 = vld [vmem:[%s3 + $0x8] sm:$0xf]
      %v626 = vld [vmem:[%s3 + $0xc] sm:$0xf]
      %v627 = vld [vmem:[%s3 + $0x10] sm:$0xf]
      %v628 = vld [vmem:[%s3 + $0x14] sm:$0xf]
      %v629 = vld [vmem:[%s3 + $0x18] sm:$0xf]
      %v630 = vld [vmem:[%s3 + $0x1c] sm:$0xf]
      %v631 = vld [vmem:[%s3 + $0x20] sm:$0xf]
      %v632 = vld [vmem:[%s3 + $0x24] sm:$0xf]
      %v633 = vld [vmem:[%s3 + $0x28] sm:$0xf]
      %v634 = vld [vmem:[%s3 + $0x2c] sm:$0xf]
      %v635 = vld [vmem:[%s3 + $0x30] sm:$0xf]
      %v636 = vld [vmem:[%s3 + $0x34] sm:$0xf]
      %v637 = vld [vmem:[%s3 + $0x38] sm:$0xf]
      %v638 = vld [vmem:[%s3 + $0x3c] sm:$0xf]
      %v639 = vld [vmem:[%s4] sm:$0x1]
      %v641 = vlaneseq
      %v642 = vshrl.u32 %v641, 7
      %v643 = vsub.s32 0, %v642
      %v644 = vrot.slane %v639, %v643
      %v662 = vunpack.c.l.b16 %v623
      %v663 = vunpack.c.l.b16 %v624
      %v664 = vunpack.c.l.b16 %v625
      %v665 = vunpack.c.l.b16 %v626
      %v666 = vunpack.c.l.b16 %v627
      %v667 = vunpack.c.l.b16 %v628
      %v668 = vunpack.c.l.b16 %v629
      %v669 = vunpack.c.l.b16 %v630
      %v670 = vunpack.c.l.b16 %v631
      %v671 = vunpack.c.l.b16 %v632
      %v672 = vunpack.c.l.b16 %v633
      %v673 = vunpack.c.l.b16 %v634
      %v674 = vunpack.c.l.b16 %v635
      %v675 = vunpack.c.l.b16 %v636
      %v676 = vunpack.c.l.b16 %v637
      %v677 = vunpack.c.l.b16 %v638
      %v678 = vpack.c.b16 %v663, %v662
      %v679 = vpack.c.b16 %v665, %v664
      %v680 = vpack.c.b16 %v667, %v666
      %v681 = vpack.c.b16 %v669, %v668
      %v682 = vpack.c.b16 %v671, %v670
      %v683 = vpack.c.b16 %v673, %v672
      %v684 = vpack.c.b16 %v675, %v674
      %v685 = vpack.c.b16 %v677, %v676
      %694 = vmatprep.subr.bf16.mxu0 0
      %695 = vmatpush1.bf16.msra.mxu0 %v678
      %696 = vmatprep.subr.bf16.mxu0 0
      %697 = vmatpush1.bf16.msra.mxu0 %v679
      %698 = vmatprep.subr.bf16.mxu0 0
      %699 = vmatpush1.bf16.msra.mxu0 %v680
      %700 = vmatprep.subr.bf16.mxu0 0
      %701 = vmatpush1.bf16.msra.mxu0 %v681
      %702 = vmatprep.subr.bf16.mxu0 0
      %703 = vmatpush1.bf16.msra.mxu0 %v682
      %704 = vmatprep.subr.bf16.mxu0 0
      %705 = vmatpush1.bf16.msra.mxu0 %v683
      %706 = vmatprep.subr.bf16.mxu0 0
      %707 = vmatpush1.bf16.msra.mxu0 %v684
      %708 = vmatprep.subr.bf16.mxu0 0
      %709 = vmatpush1.bf16.msra.mxu0 %v685
      %710 = vmatprep.subr.bf16.mxu0 0
      %711 = vmatpush1.bf16.msra.mxu0 0
      %712 = vmatprep.subr.bf16.mxu0 0
      %713 = vmatpush1.bf16.msra.mxu0 0
      %714 = vmatprep.subr.bf16.mxu0 0
      %715 = vmatpush1.bf16.msra.mxu0 0
      %716 = vmatprep.subr.bf16.mxu0 0
      %717 = vmatpush1.bf16.msra.mxu0 0
      %718 = vmatprep.subr.bf16.mxu0 0
      %719 = vmatpush1.bf16.msra.mxu0 0
      %720 = vmatprep.subr.bf16.mxu0 0
      %721 = vmatpush1.bf16.msra.mxu0 0
      %722 = vmatprep.subr.bf16.mxu0 0
      %723 = vmatpush1.bf16.msra.mxu0 0
      %724 = vmatprep.subr.bf16.mxu0 0
      %725 = vmatpush1.bf16.msra.mxu0 0
      %726 = vmatprep.mubr.bf16.mxu0 0
      %727 = vmatmul.mubr.bf16.gmra.mrb[0].mxu0 %v607
      %v728 = vpop.f32.mrb[0].mxu0
      %v729 = vadd.f32 %v644, %v728
      %v730 = vpop.f32.mrb[0].mxu0
      %v731 = vpop.f32.mrb[0].mxu0
      %v732 = vadd.f32 %v644, %v731
      %v733 = vpop.f32.mrb[0].mxu0
      %734 = vmatprep.mubr.bf16.mxu0 0
      %735 = vmatmul.mubr.bf16.gmra.mrb[0].mxu0 %v608
      %v736 = vpop.f32.mrb[0].mxu0
      %v737 = vadd.f32 %v644, %v736
      %v738 = vpop.f32.mrb[0].mxu0
      %v739 = vpop.f32.mrb[0].mxu0
      %v740 = vadd.f32 %v644, %v739
      %v741 = vpop.f32.mrb[0].mxu0
      %742 = vmatprep.mubr.bf16.mxu0 0
      %743 = vmatmul.mubr.bf16.gmra.mrb[0].mxu0 %v609
      %v744 = vpop.f32.mrb[0].mxu0
      %v745 = vadd.f32 %v644, %v744
      %v746 = vpop.f32.mrb[0].mxu0
      %v747 = vpop.f32.mrb[0].mxu0
      %v748 = vadd.f32 %v644, %v747
      %v749 = vpop.f32.mrb[0].mxu0
      %750 = vmatprep.mubr.bf16.mxu0 0
      %751 = vmatmul.mubr.bf16.gmra.mrb[0].mxu0 %v610
      %v752 = vpop.f32.mrb[0].mxu0
      %v753 = vadd.f32 %v644, %v752
      %v754 = vpop.f32.mrb[0].mxu0
      %v755 = vpop.f32.mrb[0].mxu0
      %v756 = vadd.f32 %v644, %v755
      %v757 = vpop.f32.mrb[0].mxu0
      %758 = vmatprep.mubr.bf16.mxu0 0
      %759 = vmatmul.mubr.bf16.gmra.mrb[0].mxu0 %v611
      %v760 = vpop.f32.mrb[0].mxu0
      %v761 = vadd.f32 %v644, %v760
      %v762 = vpop.f32.mrb[0].mxu0
      %v763 = vpop.f32.mrb[0].mxu0
      %v764 = vadd.f32 %v644, %v763
      %v765 = vpop.f32.mrb[0].mxu0
      %766 = vmatprep.mubr.bf16.mxu0 0
      %767 = vmatmul.mubr.bf16.gmra.mrb[0].mxu0 %v612
      %v768 = vpop.f32.mrb[0].mxu0
      %v769 = vadd.f32 %v644, %v768
      %v770 = vpop.f32.mrb[0].mxu0
      %v771 = vpop.f32.mrb[0].mxu0
      %v772 = vadd.f32 %v644, %v771
      %v773 = vpop.f32.mrb[0].mxu0
      %774 = vmatprep.mubr.bf16.mxu0 0
      %775 = vmatmul.mubr.bf16.gmra.mrb[0].mxu0 %v613
      %v776 = vpop.f32.mrb[0].mxu0
      %v777 = vadd.f32 %v644, %v776
      %v778 = vpop.f32.mrb[0].mxu0
      %v779 = vpop.f32.mrb[0].mxu0
      %v780 = vadd.f32 %v644, %v779
      %v781 = vpop.f32.mrb[0].mxu0
      %782 = vmatprep.mubr.bf16.mxu0 0
      %783 = vmatmul.mubr.bf16.gmra.mrb[0].mxu0 %v614
      %v784 = vpop.f32.mrb[0].mxu0
      %v785 = vadd.f32 %v644, %v784
      %v786 = vpop.f32.mrb[0].mxu0
      %v787 = vpop.f32.mrb[0].mxu0
      %v788 = vadd.f32 %v644, %v787
      %v789 = vpop.f32.mrb[0].mxu0
      %790 = vmatprep.mubr.bf16.mxu0 0
      %791 = vmatmul.mubr.bf16.gmra.mrb[0].mxu0 %v615
      %v792 = vpop.f32.mrb[0].mxu0
      %v793 = vadd.f32 %v644, %v792
      %v794 = vpop.f32.mrb[0].mxu0
      %v795 = vpop.f32.mrb[0].mxu0
      %v796 = vadd.f32 %v644, %v795
      %v797 = vpop.f32.mrb[0].mxu0
      %798 = vmatprep.mubr.bf16.mxu0 0
      %799 = vmatmul.mubr.bf16.gmra.mrb[0].mxu0 %v616
      %v800 = vpop.f32.mrb[0].mxu0
      %v801 = vadd.f32 %v644, %v800
      %v802 = vpop.f32.mrb[0].mxu0
      %v803 = vpop.f32.mrb[0].mxu0
      %v804 = vadd.f32 %v644, %v803
      %v805 = vpop.f32.mrb[0].mxu0
      %806 = vmatprep.mubr.bf16.mxu0 0
      %807 = vmatmul.mubr.bf16.gmra.mrb[0].mxu0 %v617
      %v808 = vpop.f32.mrb[0].mxu0
      %v809 = vadd.f32 %v644, %v808
      %v810 = vpop.f32.mrb[0].mxu0
      %v811 = vpop.f32.mrb[0].mxu0
      %v812 = vadd.f32 %v644, %v811
      %v813 = vpop.f32.mrb[0].mxu0
      %814 = vmatprep.mubr.bf16.mxu0 0
      %815 = vmatmul.mubr.bf16.gmra.mrb[0].mxu0 %v618
      %v816 = vpop.f32.mrb[0].mxu0
      %v817 = vadd.f32 %v644, %v816
      %v818 = vpop.f32.mrb[0].mxu0
      %v819 = vpop.f32.mrb[0].mxu0
      %v820 = vadd.f32 %v644, %v819
      %v821 = vpop.f32.mrb[0].mxu0
      %822 = vmatprep.mubr.bf16.mxu0 0
      %823 = vmatmul.mubr.bf16.gmra.mrb[0].mxu0 %v619
      %v824 = vpop.f32.mrb[0].mxu0
      %v825 = vadd.f32 %v644, %v824
      %v826 = vpop.f32.mrb[0].mxu0
      %v827 = vpop.f32.mrb[0].mxu0
      %v828 = vadd.f32 %v644, %v827
      %v829 = vpop.f32.mrb[0].mxu0
      %830 = vmatprep.mubr.bf16.mxu0 0
      %831 = vmatmul.mubr.bf16.gmra.mrb[0].mxu0 %v620
      %v832 = vpop.f32.mrb[0].mxu0
      %v833 = vadd.f32 %v644, %v832
      %v834 = vpop.f32.mrb[0].mxu0
      %v835 = vpop.f32.mrb[0].mxu0
      %v836 = vadd.f32 %v644, %v835
      %v837 = vpop.f32.mrb[0].mxu0
      %838 = vmatprep.mubr.bf16.mxu0 0
      %839 = vmatmul.mubr.bf16.gmra.mrb[0].mxu0 %v621
      %v840 = vpop.f32.mrb[0].mxu0
      %v841 = vadd.f32 %v644, %v840
      %v842 = vpop.f32.mrb[0].mxu0
      %v843 = vpop.f32.mrb[0].mxu0
      %v844 = vadd.f32 %v644, %v843
      %v845 = vpop.f32.mrb[0].mxu0
      %846 = vmatprep.mubr.bf16.mxu0 0
      %847 = vmatmul.mubr.bf16.gmra.mrb[0].mxu0 %v622
      %v848 = vpop.f32.mrb[0].mxu0
      %v849 = vadd.f32 %v644, %v848
      %v850 = vpop.f32.mrb[0].mxu0
      %v851 = vpop.f32.mrb[0].mxu0
      %v852 = vadd.f32 %v644, %v851
      %v853 = vpop.f32.mrb[0].mxu0
      %854 = vdwg.mxu0
      %v855 = vmax.f32 %v729, 0.0
      %v856 = vmax.f32 %v732, 0.0
      %v857 = vmax.f32 %v737, 0.0
      %v858 = vmax.f32 %v740, 0.0
      %v859 = vmax.f32 %v745, 0.0
      %v860 = vmax.f32 %v748, 0.0
      %v861 = vmax.f32 %v753, 0.0
      %v862 = vmax.f32 %v756, 0.0
      %v863 = vmax.f32 %v761, 0.0
      %v864 = vmax.f32 %v764, 0.0
      %v865 = vmax.f32 %v769, 0.0
      %v866 = vmax.f32 %v772, 0.0
      %v867 = vmax.f32 %v777, 0.0
      %v868 = vmax.f32 %v780, 0.0
      %v869 = vmax.f32 %v785, 0.0
      %v870 = vmax.f32 %v788, 0.0
      %v871 = vmax.f32 %v793, 0.0
      %v872 = vmax.f32 %v796, 0.0
      %v873 = vmax.f32 %v801, 0.0
      %v874 = vmax.f32 %v804, 0.0
      %v875 = vmax.f32 %v809, 0.0
      %v876 = vmax.f32 %v812, 0.0
      %v877 = vmax.f32 %v817, 0.0
      %v878 = vmax.f32 %v820, 0.0
      %v879 = vmax.f32 %v825, 0.0
      %v880 = vmax.f32 %v828, 0.0
      %v881 = vmax.f32 %v833, 0.0
      %v882 = vmax.f32 %v836, 0.0
      %v883 = vmax.f32 %v841, 0.0
      %v884 = vmax.f32 %v844, 0.0
      %v885 = vmax.f32 %v849, 0.0
      %v886 = vmax.f32 %v852, 0.0
      %v887 = vld [vmem:[%s5] sm:$0xf]
      %v888 = vpack.c.bf16 %v856, %v855
      %v889 = vpack.c.bf16 %v858, %v857
      %v890 = vpack.c.bf16 %v860, %v859
      %v891 = vpack.c.bf16 %v862, %v861
      %v892 = vpack.c.bf16 %v864, %v863
      %v893 = vpack.c.bf16 %v866, %v865
      %v894 = vpack.c.bf16 %v868, %v867
      %v895 = vpack.c.bf16 %v870, %v869
      %v896 = vpack.c.bf16 %v872, %v871
      %v897 = vpack.c.bf16 %v874, %v873
      %v898 = vpack.c.bf16 %v876, %v875
      %v899 = vpack.c.bf16 %v878, %v877
      %v900 = vpack.c.bf16 %v880, %v879
      %v901 = vpack.c.bf16 %v882, %v881
      %v902 = vpack.c.bf16 %v884, %v883
      %v903 = vpack.c.bf16 %v886, %v885
      %v904 = vld [vmem:[%s6] sm:$0xff]
      %906 = vset.pattern.permute.xlu0 0
      %907 = vperm.xlu0 %906, %v904
      %v908 = vpop.permute.xlu0 %907
      %910 = vmatprep.subr.bf16.mxu0 0
      %911 = vmatpush1.bf16.xpose.msra.mxu0 %v888
      %912 = vmatprep.subr.bf16.mxu0 0
      %913 = vmatpush1.bf16.xpose.msra.mxu0 %v889
      %914 = vmatprep.subr.bf16.mxu0 0
      %915 = vmatpush1.bf16.xpose.msra.mxu0 %v890
      %916 = vmatprep.subr.bf16.mxu0 0
      %917 = vmatpush1.bf16.xpose.msra.mxu0 %v891
      %918 = vmatprep.subr.bf16.mxu0 0
      %919 = vmatpush1.bf16.xpose.msra.mxu0 %v892
      %920 = vmatprep.subr.bf16.mxu0 0
      %921 = vmatpush1.bf16.xpose.msra.mxu0 %v893
      %922 = vmatprep.subr.bf16.mxu0 0
      %923 = vmatpush1.bf16.xpose.msra.mxu0 %v894
      %924 = vmatprep.subr.bf16.mxu0 0
      %925 = vmatpush1.bf16.xpose.msra.mxu0 %v895
      %926 = vmatprep.subr.bf16.mxu0 0
      %927 = vmatpush1.bf16.xpose.msra.mxu0 %v896
      %928 = vmatprep.subr.bf16.mxu0 0
      %929 = vmatpush1.bf16.xpose.msra.mxu0 %v897
      %930 = vmatprep.subr.bf16.mxu0 0
      %931 = vmatpush1.bf16.xpose.msra.mxu0 %v898
      %932 = vmatprep.subr.bf16.mxu0 0
      %933 = vmatpush1.bf16.xpose.msra.mxu0 %v899
      %934 = vmatprep.subr.bf16.mxu0 0
      %935 = vmatpush1.bf16.xpose.msra.mxu0 %v900
      %936 = vmatprep.subr.bf16.mxu0 0
      %937 = vmatpush1.bf16.xpose.msra.mxu0 %v901
      %938 = vmatprep.subr.bf16.mxu0 0
      %939 = vmatpush1.bf16.xpose.msra.mxu0 %v902
      %940 = vmatprep.subr.bf16.mxu0 0
      %941 = vmatpush1.bf16.xpose.msra.mxu0 %v903
      %942 = vmatprep.mubr.bf16.mxu0 0
      %943 = vmatmul.mubr.bf16.gmra.mrb[0].mxu0 %v887
      %v944 = vpop.f32.mrb[0].mxu0
      %v945 = vadd.f32 %v908, %v944
      %v946 = vpop.f32.mrb[0].mxu0
      %v947 = vadd.f32 %v908, %v946
      %v948 = vpop.f32.mrb[0].mxu0
      %v949 = vpop.f32.mrb[0].mxu0
      %950 = vdwg.mxu0
      %951 = vst [vmem:[%s280] sm:$0xff] %v945
      %952 = vst [vmem:[%s280 + $0x8] sm:$0xff] %v947
      %s953 = smul.u32 2, %s18
      %p954 = scmp.lt.s32.totalorder %s953, 7
      %s955 = scalar_select %p954, %s953, 7
      %s956 = smul.addr %s955, 8
      %s957 = scalar_lea.vmem %s7, %s956
      // Predicated region
      $region49: #{_lambda_.1} parent=47 // pred_check
        %p958 = pneg %p188
      $region50: #{_lambda_.1} parent=47 // pred_check_branch
        %960 = sbr.rel (%p958) target = $region52
      $region51: #{_lambda_.1} parent=47 // pred_region
        %s961 = smul.u32 2, %s18
      $region52: #{_lambda_.1} parent=47 // pred_fallthru
        _
    $region48: #{_lambda_.1} parent=5 // pred_fallthru
      _
    %p962 = scmp.le.s32.totalorder 2, %s13
    // Predicated region
    $region53: #{_lambda_.1} parent=5 // pred_check
      %p963 = pneg %p962
    $region54: #{_lambda_.1} parent=5 // pred_check_branch
      %965 = sbr.rel (%p963) target = $region56
    $region55: #{_lambda_.1} parent=5 // pred_region
      %s966 = ssub.s32 %s13, 2
      // Predicated region
      $region57: #{_lambda_.1} parent=55 // pred_check
        %p967 = pneg %p194
      $region58: #{_lambda_.1} parent=55 // pred_check_branch
        %969 = sbr.rel (%p967) target = $region60
      $region59: #{_lambda_.1} parent=55 // pred_region
        %s970 = smul.u32 2, %s19
        %p971 = scmp.lt.s32.totalorder %s970, 7
        %s972 = scalar_select %p971, %s970, 7
        %s973 = smul.addr %s972, 8
        %s974 = scalar_lea.vmem %s7, %s973
      $region60: #{_lambda_.1} parent=55 // pred_fallthru
        _
    $region56: #{_lambda_.1} parent=5 // pred_fallthru
      _
  $region6: #{_lambda_.1} parent=0 // loop_footer
    %s17 = sadd.s32 1, %s13
  $region7: #{_lambda_.1} parent=0 // loop_footer_branch
    %12 = sbr.rel target = $region3
  $region8: #{_lambda_.1} parent=0 // loop_exit
    _

</llo_original>
